<compile_context>
chip_gen: v6e
topology: v6e:2x2x1
jax: 0.10.0
libtpu: 0.0.40
codegen_flags: <defaults>
</compile_context>

<pallas_src>
import functools

import jax
import jax.numpy as jnp
from jax.experimental import pallas as pl
from jax.experimental.pallas import tpu as pltpu

NOISE_SCALE = 3.0
NUM_XFORMS = 7                                  # 7 flame transforms
NUM_PARAMS = 10                                 # 10 params per transform
_W_END = NUM_XFORMS                             # lanes [0, 7)   : weights
_C_END = 2 * NUM_XFORMS                         # lanes [7, 14)  : colours
_P_END = _C_END + NUM_XFORMS * NUM_PARAMS       # lanes [14, 84) : params (7x10 flat)
LANES = 128                                     # lane-dense slab width


def _flame_kernel(param_ref, noise_ref, out_ref):
    """param (1,128) VMEM, noise (B,128) VMEM -> out (B,128) VMEM.

    Shared lane layout: [0:7) weights | [7:14) colours | [14:84) params | [84:128) zero pad.
    One broadcast multiply produces all three scaled quantities; the softmax is
    done over the 7 weight lanes with an iota mask, and a single lane-select
    assembles the unmasked 128-lane output store.
    """
    p = param_ref[...]                                  # (1, 128) broadcast over batch
    scaled = p * (NOISE_SCALE * noise_ref[...])         # (B, 128)

    batch = scaled.shape[0]
    lane = jax.lax.broadcasted_iota(jnp.int32, (batch, LANES), 1)
    w_lane = lane < _W_END

    # softmax over the 7 weight lanes (other lanes -> -inf -> exp == 0).
    logits = jnp.where(w_lane, scaled, -jnp.inf)
    m = jnp.max(logits, axis=-1, keepdims=True)
    e = jnp.exp(logits - m)
    weights = e / jnp.sum(e, axis=-1, keepdims=True)

    # colours = clamp(scaled, 0, 1) on their lanes; params pass through scaled.
    clipped = jnp.clip(scaled, 0.0, 1.0)

    # Padding lanes (>= 84) carry 0*noise == 0, so the output pad is deterministic zeros.
    out_ref[...] = jnp.where(w_lane, weights,
                             jnp.where(lane < _C_END, clipped, scaled))


@functools.partial(jax.jit, static_argnames=("batch_size", "height", "width"))
def fractal_flame_forward(weights_param, params_param, colours_param, key,
                          batch_size, height, width):
    """One forward pass. Returns (imgs, weights, params, colours)."""
    # Single (1, 128) parameter slab: weights || colours || params_flat || zero pad.
    param_block = jnp.concatenate(
        [weights_param.astype(jnp.float32),
         colours_param.astype(jnp.float32),
         params_param.reshape(1, NUM_XFORMS * NUM_PARAMS).astype(jnp.float32),
         jnp.zeros((1, LANES - _P_END), jnp.float32)],
        axis=1)

    # Single lane-dense (B, 128) U[0,1) noise slab (independent draws per lane,
    # matching the three independent torch.rand calls distributionally).
    noise = jax.random.uniform(key, (batch_size, LANES), dtype=jnp.float32)

    out = pl.pallas_call(
        _flame_kernel,
        out_shape=jax.ShapeDtypeStruct((batch_size, LANES), jnp.float32),
        in_specs=[
            pl.BlockSpec(memory_space=pltpu.MemorySpace.VMEM),   # params slab (1, 128)
            pl.BlockSpec(memory_space=pltpu.MemorySpace.VMEM),   # noise slab  (B, 128)
        ],
        out_specs=pl.BlockSpec(memory_space=pltpu.MemorySpace.VMEM),
    )(param_block, noise)

    weights = out[:, :_W_END]
    colours = out[:, _W_END:_C_END]
    params = out[:, _C_END:_P_END].reshape(batch_size, NUM_XFORMS, NUM_PARAMS)

    # self.imgs.zero_(): plain broadcast/memset outside the kernel — the image
    # was >99% of bytes moved and gains nothing from a VMEM round trip.
    imgs = jnp.zeros((batch_size, 3, height, width), jnp.float32)
    return imgs, weights, params, colours


if __name__ == "__main__":
    # Small shapes consistent with the module (module default is B=64, 64x64).
    batch_size, height, width = 8, 16, 16

    key = jax.random.PRNGKey(0)
    k_w, k_p, k_c, k_noise = jax.random.split(key, 4)

    # Deterministic parameter init mirroring nn.Parameter shapes:
    #   weights ~ randn(1, 7), params ~ randn(1, 7, 10), colours ~ rand(1, 7)
    weights_param = jax.random.normal(k_w, (1, NUM_XFORMS), jnp.float32)
    params_param = jax.random.normal(k_p, (1, NUM_XFORMS, NUM_PARAMS), jnp.float32)
    colours_param = jax.random.uniform(k_c, (1, NUM_XFORMS), jnp.float32)

    imgs, w_out, p_out, c_out = fractal_flame_forward(
        weights_param, params_param, colours_param, k_noise,
        batch_size=batch_size, height=height, width=width)

    jax.block_until_ready((imgs, w_out, p_out, c_out))

    # Basic sanity checks of the reproduced semantics.
    assert imgs.shape == (batch_size, 3, height, width)
    assert w_out.shape == (batch_size, NUM_XFORMS)
    assert p_out.shape == (batch_size, NUM_XFORMS, NUM_PARAMS)
    assert c_out.shape == (batch_size, NUM_XFORMS)
    assert bool(jnp.all(imgs == 0.0))
    assert bool(jnp.allclose(jnp.sum(w_out, axis=1), 1.0, atol=1e-5))
    assert bool(jnp.all((w_out >= 0.0) & (w_out <= 1.0)))
    assert bool(jnp.all((c_out >= 0.0) & (c_out <= 1.0)))
    assert bool(jnp.all(jnp.isfinite(p_out)))
    # Noise really varies across the batch (rows are not identical).
    assert bool(jnp.any(jnp.abs(w_out[0] - w_out[1]) > 0))

    # Cross-check against a pure-JAX reference using the same noise slab.
    noise_ref = jax.random.uniform(k_noise, (batch_size, LANES), dtype=jnp.float32)
    ref_w = jax.nn.softmax(weights_param * NOISE_SCALE * noise_ref[:, :_W_END], axis=1)
    ref_c = jnp.clip(colours_param * NOISE_SCALE * noise_ref[:, _W_END:_C_END], 0.0, 1.0)
    ref_p = (params_param.reshape(1, -1) * NOISE_SCALE * noise_ref[:, _C_END:_P_END]
             ).reshape(batch_size, NUM_XFORMS, NUM_PARAMS)
    assert bool(jnp.allclose(w_out, ref_w, atol=1e-5))
    assert bool(jnp.allclose(c_out, ref_c, atol=1e-6))
    assert bool(jnp.allclose(p_out, ref_p, atol=1e-6))

    print("KERNEL_OK")
</pallas_src>

<mosaic_0001>
module attributes {stable_mosaic.version = 11 : i64} {
  func.func @_flame_kernel(%arg0: memref<1x128xf32, #tpu.memory_space<vmem>>, %arg1: memref<8x128xf32, #tpu.memory_space<vmem>>, %arg2: memref<8x128xf32, #tpu.memory_space<vmem>>) attributes {dimension_semantics = [], scalar_prefetch = 0 : i64, scratch_operands = 0 : i64, tpu.core_type = #tpu.core_type<tc>} {
    %c0 = arith.constant 0 : index
    %c0_0 = arith.constant 0 : index
    %0 = vector.load %arg0[%c0, %c0_0] : memref<1x128xf32, #tpu.memory_space<vmem>>, vector<1x128xf32>
    %c0_1 = arith.constant 0 : index
    %c0_2 = arith.constant 0 : index
    %1 = vector.load %arg1[%c0_1, %c0_2] : memref<8x128xf32, #tpu.memory_space<vmem>>, vector<8x128xf32>
    %cst = arith.constant 3.000000e+00 : f32
    %2 = vector.broadcast %cst : f32 to vector<8x128xf32>
    %3 = arith.mulf %2, %1 : vector<8x128xf32>
    %4 = vector.broadcast %0 : vector<1x128xf32> to vector<8x128xf32>
    %5 = arith.mulf %4, %3 : vector<8x128xf32>
    %6 = tpu.iota {dimensions = array<i32: 1>} : vector<8x128xi32>
    %c7_i32 = arith.constant 7 : i32
    %7 = vector.broadcast %c7_i32 : i32 to vector<8x128xi32>
    %8 = arith.cmpi slt, %6, %7 : vector<8x128xi32>
    %cst_3 = arith.constant 0xFF800000 : f32
    %9 = vector.broadcast %cst_3 : f32 to vector<8x128xf32>
    %10 = arith.select %8, %5, %9 : vector<8x128xi1>, vector<8x128xf32>
    %cst_4 = arith.constant dense<0xFF800000> : vector<8xf32>
    %11 = vector.multi_reduction <maximumf>, %10, %cst_4 [1] : vector<8x128xf32> to vector<8xf32>
    %12 = vector.shape_cast %11 : vector<8xf32> to vector<8x1xf32>
    %13 = vector.broadcast %12 : vector<8x1xf32> to vector<8x128xf32>
    %14 = arith.subf %10, %13 : vector<8x128xf32>
    %15 = math.exp %14 : vector<8x128xf32>
    %cst_5 = arith.constant dense<0.000000e+00> : vector<8xf32>
    %16 = vector.multi_reduction <add>, %15, %cst_5 [1] : vector<8x128xf32> to vector<8xf32>
    %17 = vector.shape_cast %16 : vector<8xf32> to vector<8x1xf32>
    %18 = vector.broadcast %17 : vector<8x1xf32> to vector<8x128xf32>
    %19 = arith.divf %15, %18 : vector<8x128xf32>
    %cst_6 = arith.constant 0.000000e+00 : f32
    %cst_7 = arith.constant 1.000000e+00 : f32
    %20 = vector.broadcast %cst_6 : f32 to vector<8x128xf32>
    %21 = arith.maximumf %20, %5 : vector<8x128xf32>
    %22 = vector.broadcast %cst_7 : f32 to vector<8x128xf32>
    %23 = arith.minimumf %22, %21 : vector<8x128xf32>
    %c14_i32 = arith.constant 14 : i32
    %24 = vector.broadcast %c14_i32 : i32 to vector<8x128xi32>
    %25 = arith.cmpi slt, %6, %24 : vector<8x128xi32>
    %26 = arith.select %25, %23, %5 : vector<8x128xi1>, vector<8x128xf32>
    %27 = arith.select %8, %19, %26 : vector<8x128xi1>, vector<8x128xf32>
    %c0_8 = arith.constant 0 : index
    %c0_9 = arith.constant 0 : index
    %28 = vector.load %arg2[%c0_8, %c0_9] : memref<8x128xf32, #tpu.memory_space<vmem>>, vector<8x128xf32>
    tpu.vector_store %arg2[%c0_8, %c0_9], %27 {strides = array<i32>} : memref<8x128xf32, #tpu.memory_space<vmem>>, vector<8x128xf32>,
    return
  }
}

</mosaic_0001>

<llo_original>
// kernel: fractal_flame_forward.1
$region0: #{fractal_flame_forward.1}
  #allocation0 [shape = 'u32[]', space=smem, size = 0x4, offset = 0x4, fixed_abs, tag = 'smem constant byte address 0x4 - core index']
  #allocation1 [shape = 'u32[144,128]{1,0:T(1,128)}', space=vmem, size = 0x12000, scoped, tag = 'internal scratch']
  %s0 = inlined_call_operand.vmem [shape: f32[1,128], index: 0, kind: input, shape index: {}]
  %s1 = inlined_call_operand.vmem [shape: f32[8,128], index: 1, kind: input, shape index: {}]
  %s2 = inlined_call_operand.vmem [shape: f32[8,128], index: 2, kind: output, shape index: {}]
  %s3 = sld [smem:[#allocation0]]
  $region18: #{fractal_flame_forward.1} parent=0
    _
  %s5 = ssub.s32 1, %s3
  %s6 = scalar_select 0, %s5, %s3
  // Predicated region
  $region2: #{fractal_flame_forward.1} parent=0 // pred_check
    _
  $region3: #{fractal_flame_forward.1} parent=0 // pred_check_branch
    %8 = sbr.rel (0) target = $region5
  $region4: #{fractal_flame_forward.1} parent=0 // pred_region
    _
  $region5: #{fractal_flame_forward.1} parent=0 // pred_fallthru
    _
  // Predicated region
  $region6: #{fractal_flame_forward.1} parent=0 // pred_check
    _
  $region7: #{fractal_flame_forward.1} parent=0 // pred_check_branch
    %10 = sbr.rel (0) target = $region9
  $region8: #{fractal_flame_forward.1} parent=0 // pred_region
    _
  $region9: #{fractal_flame_forward.1} parent=0 // pred_fallthru
    _
  %v11 = vld [vmem:[%s0] sm:$0x1]
  %v12 = vld [vmem:[%s1] sm:$0xff]
  %v13 = vmul.f32 %v12, 3.0
  %v15 = vlaneseq
  %v16 = vshrl.u32 %v15, 7
  %v17 = vsub.s32 0, %v16
  %v18 = vrot.slane %v11, %v17
  %v20 = vmul.f32 %v18, %v13
  %v21 = vlaneseq
  %v22 = vand.u32 %v21, 127
  %vm23 = vcmp.lt.s32.totalorder %v22, 7
  %v24 = vsel %vm23, %v20, -inf
  %25 = vmax.xlane.f32.xlu0 %v24
  %v26 = vpop.xlane.xlu0 %25
  %v27 = vsub.f32 %v24, %v26
  %v28 = vmul.f32 %v27, 1.442695
  %v29 = vpow.pop %v28
  %30 = vadd.xlane.f32.xlu0 %v29
  %v31 = vpop.xlane.xlu0 %30
  %v32 = vrcp.pop %v31
  %v33 = vmul.f32 %v29, %v32
  %v34 = vmax.f32 %v20, 0.0
  %v35 = vmin.f32 %v34, 1.0
  %vm36 = vcmp.lt.s32.totalorder %v22, 14
  %v37 = vsel %vm36, %v35, %v20
  %v38 = vsel %vm23, %v33, %v37
  %39 = vst [vmem:[%s2] sm:$0xff] %v38
  // Predicated region
  $region10: #{fractal_flame_forward.1} parent=0 // pred_check
    _
  $region11: #{fractal_flame_forward.1} parent=0 // pred_check_branch
    %41 = sbr.rel (0) target = $region13
  $region12: #{fractal_flame_forward.1} parent=0 // pred_region
    _
  $region13: #{fractal_flame_forward.1} parent=0 // pred_fallthru
    _
  // Predicated region
  $region14: #{fractal_flame_forward.1} parent=0 // pred_check
    _
  $region15: #{fractal_flame_forward.1} parent=0 // pred_check_branch
    %43 = sbr.rel (0) target = $region17
  $region16: #{fractal_flame_forward.1} parent=0 // pred_region
    _
  $region17: #{fractal_flame_forward.1} parent=0 // pred_fallthru
    _

</llo_original>
